<compile_context>
chip_gen: v7x
topology: tpu7x:2x2x1
jax: 0.10.0
libtpu: 0.0.40
codegen_flags: <defaults>
</compile_context>

<pallas_src>
import functools

import jax
import jax.numpy as jnp
from jax.experimental import pallas as pl
from jax.experimental.pallas import tpu as pltpu

LN_EPS = 1e-5  # torch.nn.LayerNorm default


def _pick_block(total, target, align):
    """Largest divisor of `total` that is <= target and a multiple of `align`,
    falling back to `total` (full extent is always a legal block)."""
    best = None
    upper = min(total, target)
    for d in range(align, upper + 1, align):
        if total % d == 0:
            best = d
    return best if best is not None else total


# ---------------------------------------------------------------------------
# Stage 1: batched x-branch (Linear + LayerNorm) over all T*B rows.
# ---------------------------------------------------------------------------
def xbranch_kernel(x_ref, wx_ref, b_ref, g_ref, beta_ref, o_ref, acc_ref):
    k = pl.program_id(1)

    @pl.when(k == 0)
    def _():
        acc_ref[...] = jnp.zeros_like(acc_ref)

    # bf16 MXU matmul, f32 accumulation; x cast to bf16 under the MXU.
    acc_ref[...] += jnp.dot(x_ref[...].astype(wx_ref.dtype), wx_ref[...],
                            preferred_element_type=jnp.float32)

    @pl.when(k == pl.num_programs(1) - 1)
    def _():
        lin = acc_ref[...] + b_ref[...]
        mean = jnp.mean(lin, axis=-1, keepdims=True)
        msq = jnp.mean(lin * lin, axis=-1, keepdims=True)
        o_ref[...] = ((lin - mean) * jax.lax.rsqrt(msq - mean * mean + LN_EPS)
                      * g_ref[...] + beta_ref[...])


def _xbranch_precompute(x_flat, params):
    """(R, Xin) f32 -> (R, 4H) f32 = LN(x @ w_x + b_x) * gamma_x + beta_x,
    with the x-branch gate columns already permuted to (i, f, g, o)."""
    R, Xin = x_flat.shape
    H4 = params["w_x"].shape[1]

    # ~256 rows/tile fills v6e/v7x's 256-wide MXU; keep >=2 row blocks when
    # possible so v7x's two TensorCores both get work on the 'parallel' axis.
    row_target = min(256, max(8, R // 2))
    tm = _pick_block(R, row_target, 8)
    tk = _pick_block(Xin, 1024, 128)
    nr, nk = R // tm, Xin // tk

    const = lambda r, k: (0, 0)
    return pl.pallas_call(
        xbranch_kernel,
        out_shape=jax.ShapeDtypeStruct((R, H4), jnp.float32),
        grid=(nr, nk),
        in_specs=[
            pl.BlockSpec((tm, tk), lambda r, k: (r, k)),   # x (f32, cast in-kernel)
            pl.BlockSpec((tk, H4), lambda r, k: (k, 0)),   # w_x (bf16)
            pl.BlockSpec((1, H4), const),                  # bias_x (perm)
            pl.BlockSpec((1, H4), const),                  # gamma_x (perm)
            pl.BlockSpec((1, H4), const),                  # beta_x (perm)
        ],
        out_specs=pl.BlockSpec((tm, H4), lambda r, k: (r, 0)),
        scratch_shapes=[pltpu.VMEM((tm, H4), jnp.float32)],
        compiler_params=pltpu.CompilerParams(
            dimension_semantics=("parallel", "arbitrary"),
            vmem_limit_bytes=32 * 1024 * 1024),
    )(x_flat, params["w_x"], params["b_x"], params["g_x"], params["beta_x"])


# ---------------------------------------------------------------------------
# Stage 2: fused recurrence.  One grid step = Tc fully-unrolled timesteps.
# ---------------------------------------------------------------------------
def fclstm_rec_kernel(
    lnx_ref,    # (Tc, bm, 4H) f32  -- precomputed x branch, (i,f,g,o) order
    h0_ref,     # (bm, H)      f32
    c0_ref,     # (bm, H)      f32
    wh_ref,     # (H, 4H)      bf16  -- resident
    bh_ref,     # (bm, 4H)     f32   -- resident (pre-broadcast)
    gh_ref,     # (bm, 4H)     f32
    betah_ref,  # (bm, 4H)     f32
    cti_ref,    # (bm, H)      f32   ct_weight[:H]
    ctf_ref,    # (bm, H)      f32   ct_weight[H:]
    ocw_ref,    # (bm, H)      f32
    hc_ref,     # (Tc, bm, 2H) f32   [h_new | c_new]
    h_sc, c_sc,  # (bm, H) f32 scratch -> recurrent carry across grid steps
    *, num_hidden, forget_bias, t_chunk,
):
    H = num_hidden

    @pl.when(pl.program_id(1) == 0)
    def _():
        h_sc[...] = h0_ref[...]
        c_sc[...] = c0_ref[...]

    wh = wh_ref[...]
    bh = bh_ref[...]
    gh = gh_ref[...]
    betah = betah_ref[...]
    cti = cti_ref[...]
    ctf = ctf_ref[...]
    ocw = ocw_ref[...]

    h = h_sc[...]
    c = c_sc[...]
    # Static, fully-unrolled Tc-step inner loop (Tc is small): equivalent to
    # lax.fori_loop(..., unroll=True) and keeps every ref index static.
    for tt in range(t_chunk):
        h_lin = jnp.dot(h.astype(wh.dtype), wh,
                        preferred_element_type=jnp.float32) + bh
        mean = jnp.mean(h_lin, axis=-1, keepdims=True)
        msq = jnp.mean(h_lin * h_lin, axis=-1, keepdims=True)
        ln_h = ((h_lin - mean) * jax.lax.rsqrt(msq - mean * mean + LN_EPS)
                * gh + betah)

        gates = ln_h + lnx_ref[tt]                       # both (i,f,g,o)
        i_ = jax.nn.sigmoid(gates[:, 0 * H:1 * H] + c * cti)
        f_ = jax.nn.sigmoid(gates[:, 1 * H:2 * H] + c * ctf + forget_bias)
        c = f_ * c + i_ * jnp.tanh(gates[:, 2 * H:3 * H])
        h = jax.nn.sigmoid(gates[:, 3 * H:4 * H] + c * ocw) * jnp.tanh(c)
        hc_ref[tt] = jnp.concatenate([h, c], axis=-1)

    h_sc[...] = h
    c_sc[...] = c


def fclstm_forward_seq(x_seq, h0, c0, params, *, num_hidden, forget_bias=1.0,
                       batch_block=None, time_chunk=None):
    """Runs T FCLSTMCell steps.  x_seq: (T, B, in_channel*width*width);
    h0, c0: (B, num_hidden).  The recurrence feeds h_new back into fc_h, so
    in_channel == num_hidden.  Returns (h_seq, c_seq), each (T, B, H)."""
    T, B, Xin = x_seq.shape
    H = num_hidden
    assert h0.shape == (B, H) and c0.shape == (B, H)
    in_ch = params["w_h"].shape[0]
    assert in_ch == H, "recurrent use requires in_channel == num_hidden"

    # Batch blocking: >=2 blocks when the batch allows, so v7x's two
    # TensorCores both get work on the 'parallel' axis; always 8-aligned.
    if batch_block is None:
        bm = B // 2 if (B >= 16 and (B // 2) % 8 == 0) else B
    else:
        bm = batch_block
    assert B % bm == 0 and bm % 8 == 0, "pad batch to a multiple of 8"
    nb = B // bm

    # Time chunking: Tc unrolled steps per grid step amortizes the ~0.35us
    # per-grid-step overhead and widens the writeback to (Tc*bm, 2H).
    Tc = _pick_block(T, 8, 1) if time_chunk is None else time_chunk
    assert T % Tc == 0
    nT = T // Tc

    # ---- Stage 1: batched x-branch (matmul + LN), off the serial path. ----
    ln_x = _xbranch_precompute(x_seq.reshape(T * B, Xin), params)
    ln_x = ln_x.reshape(T, B, 4 * H)

    # ---- Stage 2: fused recurrence. ----
    # Pre-broadcast per-channel params so the kernel has no sublane broadcasts
    # inside the unrolled time loop; these are tiny and stay VMEM-resident.
    bh = jnp.broadcast_to(params["b_h"], (bm, 4 * H))
    gh = jnp.broadcast_to(params["g_h"], (bm, 4 * H))
    betah = jnp.broadcast_to(params["beta_h"], (bm, 4 * H))
    cti = jnp.broadcast_to(params["ct_i"], (bm, H))
    ctf = jnp.broadcast_to(params["ct_f"], (bm, H))
    ocw = jnp.broadcast_to(params["oc"], (bm, H))

    const = lambda b, t: (0, 0)
    kernel = functools.partial(fclstm_rec_kernel, num_hidden=H,
                               forget_bias=forget_bias, t_chunk=Tc)

    hc_seq = pl.pallas_call(
        kernel,
        out_shape=jax.ShapeDtypeStruct((T, B, 2 * H), jnp.float32),
        grid=(nb, nT),
        in_specs=[
            pl.BlockSpec((Tc, bm, 4 * H), lambda b, t: (t, b, 0)),  # ln_x chunk
            pl.BlockSpec((bm, H), lambda b, t: (b, 0)),             # h0
            pl.BlockSpec((bm, H), lambda b, t: (b, 0)),             # c0
            pl.BlockSpec((in_ch, 4 * H), const),                    # w_h (resident)
            pl.BlockSpec((bm, 4 * H), const),                       # bias_h
            pl.BlockSpec((bm, 4 * H), const),                       # gamma_h
            pl.BlockSpec((bm, 4 * H), const),                       # beta_h
            pl.BlockSpec((bm, H), const),                           # ct_weight[:H]
            pl.BlockSpec((bm, H), const),                           # ct_weight[H:]
            pl.BlockSpec((bm, H), const),                           # oc_weight
        ],
        out_specs=pl.BlockSpec((Tc, bm, 2 * H), lambda b, t: (t, b, 0)),
        scratch_shapes=[pltpu.VMEM((bm, H), jnp.float32),
                        pltpu.VMEM((bm, H), jnp.float32)],
        compiler_params=pltpu.CompilerParams(
            dimension_semantics=("parallel", "arbitrary")),
    )(ln_x, h0, c0, params["w_h"], bh, gh, betah, cti, ctf, ocw)

    return hc_seq[..., :H], hc_seq[..., H:]


# ---------------------------------------------------------------------------
# Host-side parameter plumbing (free): transpose Linear weights to [in, out],
# cast the big weights to bf16, permute the x-branch gate columns from torch's
# (i,g,f,o) split order to the h-branch's (i,f,g,o) order (LayerNorm over the
# full 4H axis is permutation-invariant), split ct_weight into i/f halves.
# ---------------------------------------------------------------------------
def prepare_params(raw, num_hidden):
    H = num_hidden
    perm = jnp.concatenate([
        jnp.arange(0, H), jnp.arange(2 * H, 3 * H),
        jnp.arange(H, 2 * H), jnp.arange(3 * H, 4 * H)])
    return {
        "w_h": raw["fc_h_w"].T.astype(jnp.bfloat16),            # (in_ch, 4H)
        "b_h": raw["fc_h_b"][None, :],
        "g_h": raw["ln_h_g"][None, :],
        "beta_h": raw["ln_h_b"][None, :],
        "w_x": raw["fc_x_w"].T[:, perm].astype(jnp.bfloat16),   # (Xin, 4H)
        "b_x": raw["fc_x_b"][perm][None, :],
        "g_x": raw["ln_x_g"][perm][None, :],
        "beta_x": raw["ln_x_b"][perm][None, :],
        "ct_i": raw["ct_weight"][None, :H],
        "ct_f": raw["ct_weight"][None, H:],
        "oc": raw["oc_weight"][None, :],
    }


def make_raw_params(key, in_channel, num_hidden, width):
    """Deterministic synthetic params in torch layout (Linear weight=[out,in])."""
    H4 = 4 * num_hidden
    Xin = in_channel * width * width
    ks = jax.random.split(key, 10)
    s = 0.1
    n = jax.random.normal
    return {
        "fc_h_w": s * n(ks[0], (H4, in_channel), jnp.float32),
        "fc_h_b": s * n(ks[1], (H4,), jnp.float32),
        "ln_h_g": 1.0 + s * n(ks[2], (H4,), jnp.float32),
        "ln_h_b": s * n(ks[3], (H4,), jnp.float32),
        "fc_x_w": s * n(ks[4], (H4, Xin), jnp.float32),
        "fc_x_b": s * n(ks[5], (H4,), jnp.float32),
        "ln_x_g": 1.0 + s * n(ks[6], (H4,), jnp.float32),
        "ln_x_b": s * n(ks[7], (H4,), jnp.float32),
        "ct_weight": s * n(ks[8], (2 * num_hidden,), jnp.float32),
        "oc_weight": s * n(ks[9], (num_hidden,), jnp.float32),
    }


def fclstm_step_reference(x_t, h_t, c_t, raw, *, num_hidden, forget_bias=1.0):
    """Pure-JAX mirror of FCLSTMCell.forward (same bf16-weight / f32-accumulate
    dtype policy as the kernels), using unpermuted torch-layout params."""
    def ln(y, g, b):
        m = jnp.mean(y, axis=-1, keepdims=True)
        v = jnp.mean((y - m) ** 2, axis=-1, keepdims=True)
        return (y - m) * jax.lax.rsqrt(v + LN_EPS) * g + b

    wh = raw["fc_h_w"].astype(jnp.bfloat16)
    wx = raw["fc_x_w"].astype(jnp.bfloat16)
    h_concat = ln(jnp.dot(h_t.astype(jnp.bfloat16), wh.T,
                          preferred_element_type=jnp.float32) + raw["fc_h_b"],
                  raw["ln_h_g"], raw["ln_h_b"])
    x_concat = ln(jnp.dot(x_t.astype(jnp.bfloat16), wx.T,
                          preferred_element_type=jnp.float32) + raw["fc_x_b"],
                  raw["ln_x_g"], raw["ln_x_b"])
    i_h, f_h, g_h, o_h = jnp.split(h_concat, 4, axis=1)
    i_c, f_c = jnp.split(jnp.tile(c_t, (1, 2)) * raw["ct_weight"], 2, axis=1)
    i_x, g_x, f_x, o_x = jnp.split(x_concat, 4, axis=1)
    i_ = jax.nn.sigmoid(i_h + i_c + i_x)
    f_ = jax.nn.sigmoid(f_h + f_c + f_x + forget_bias)
    g_ = g_h + g_x
    o_ = o_h + o_x
    c_new = f_ * c_t + i_ * jnp.tanh(g_)
    h_new = jax.nn.sigmoid(o_ + c_new * raw["oc_weight"]) * jnp.tanh(c_new)
    return h_new, c_new


if __name__ == "__main__":
    # Small shapes.  The fused recurrence feeds h_new back into fc_h, so
    # in_channel == num_hidden; batch=8 fills the 8-row sublane dimension.
    B, num_hidden, width, T = 8, 32, 16, 8
    in_channel = num_hidden
    Xin = in_channel * width * width

    key = jax.random.PRNGKey(0)
    k_x, k_h, k_c, k_p = jax.random.split(key, 4)
    x_seq = jax.random.normal(k_x, (T, B, Xin), jnp.float32)
    h0 = jax.random.normal(k_h, (B, num_hidden), jnp.float32)
    c0 = jax.random.normal(k_c, (B, num_hidden), jnp.float32)
    raw = make_raw_params(k_p, in_channel, num_hidden, width)
    params = prepare_params(raw, num_hidden)

    # TODO(synk): the PyTorch forward also allows x_t=None (skip the fc_x
    # branch); only the x_t-present path is implemented here.

    h_seq, c_seq = fclstm_forward_seq(x_seq, h0, c0, params,
                                      num_hidden=num_hidden)
    jax.block_until_ready((h_seq, c_seq))

    # Step-by-step reference with identical dtype policy.
    h, c = h0, c0
    h_refs, c_refs = [], []
    for t in range(T):
        h, c = fclstm_step_reference(x_seq[t], h, c, raw,
                                     num_hidden=num_hidden)
        h_refs.append(h)
        c_refs.append(c)
    h_ref = jnp.stack(h_refs)
    c_ref = jnp.stack(c_refs)

    assert h_seq.shape == (T, B, num_hidden)
    assert c_seq.shape == (T, B, num_hidden)
    assert jnp.allclose(h_seq, h_ref, atol=5e-3, rtol=5e-3), \
        float(jnp.max(jnp.abs(h_seq - h_ref)))
    assert jnp.allclose(c_seq, c_ref, atol=5e-3, rtol=5e-3), \
        float(jnp.max(jnp.abs(c_seq - c_ref)))

    print("KERNEL_OK")
</pallas_src>

<mosaic_0001>
module attributes {stable_mosaic.version = 11 : i64} {
  func.func @xbranch_kernel(%arg0: i32, %arg1: i32, %arg2: memref<32x1024xf32, #tpu.memory_space<vmem>>, %arg3: memref<1024x128xbf16, #tpu.memory_space<vmem>>, %arg4: memref<1x128xf32, #tpu.memory_space<vmem>>, %arg5: memref<1x128xf32, #tpu.memory_space<vmem>>, %arg6: memref<1x128xf32, #tpu.memory_space<vmem>>, %arg7: memref<32x128xf32, #tpu.memory_space<vmem>>, %arg8: memref<32x128xf32, #tpu.memory_space<vmem>>) attributes {dimension_semantics = [#tpu.dimension_semantics<parallel>, #tpu.dimension_semantics<arbitrary>], iteration_bounds = array<i64: 2, 8>, scalar_prefetch = 0 : i64, scratch_operands = 1 : i64, tpu.core_type = #tpu.core_type<tc>, window_params = [{transform_indices = @transform_0, window_bounds = array<i64: 32, 1024>}, {transform_indices = @transform_1, window_bounds = array<i64: 1024, 128>}, {pipeline_mode = #tpu.pipeline_mode<synchronous>, transform_indices = @transform_2, window_bounds = array<i64: 1, 128>}, {pipeline_mode = #tpu.pipeline_mode<synchronous>, transform_indices = @transform_3, window_bounds = array<i64: 1, 128>}, {pipeline_mode = #tpu.pipeline_mode<synchronous>, transform_indices = @transform_4, window_bounds = array<i64: 1, 128>}, {transform_indices = @transform_5, window_bounds = array<i64: 32, 128>}]} {
    %c0_i32 = arith.constant 0 : i32
    %0 = arith.cmpi eq, %arg1, %c0_i32 : i32
    %1 = arith.extui %0 : i1 to i32
    %c0_i32_0 = arith.constant 0 : i32
    %2 = arith.cmpi ne, %1, %c0_i32_0 : i32
    scf.if %2 {
      %cst_9 = arith.constant 0.000000e+00 : f32
      %13 = vector.broadcast %cst_9 : f32 to vector<32x128xf32>
      %c0_10 = arith.constant 0 : index
      %c0_11 = arith.constant 0 : index
      %14 = vector.load %arg8[%c0_10, %c0_11] : memref<32x128xf32, #tpu.memory_space<vmem>>, vector<32x128xf32>
      tpu.vector_store %arg8[%c0_10, %c0_11], %13 {strides = array<i32>} : memref<32x128xf32, #tpu.memory_space<vmem>>, vector<32x128xf32>,
    } else {
    }
    %c0 = arith.constant 0 : index
    %c0_1 = arith.constant 0 : index
    %3 = vector.load %arg8[%c0, %c0_1] : memref<32x128xf32, #tpu.memory_space<vmem>>, vector<32x128xf32>
    %c0_2 = arith.constant 0 : index
    %c0_3 = arith.constant 0 : index
    %4 = vector.load %arg2[%c0_2, %c0_3] : memref<32x1024xf32, #tpu.memory_space<vmem>>, vector<32x1024xf32>
    %5 = arith.truncf %4 : vector<32x1024xf32> to vector<32x1024xbf16>
    %c0_4 = arith.constant 0 : index
    %c0_5 = arith.constant 0 : index
    %6 = vector.load %arg3[%c0_4, %c0_5] : memref<1024x128xbf16, #tpu.memory_space<vmem>>, vector<1024x128xbf16>
    %cst = arith.constant dense<0.000000e+00> : vector<32x128xf32>
    %7 = tpu.matmul %5, %6, %cst {dimension_numbers = #tpu.dot_dimension_numbers<[1], [0], [0], [1], [0, 0, 1, 1], [], []>} : vector<32x1024xbf16>, vector<1024x128xbf16>, vector<32x128xf32> -> vector<32x128xf32>
    %8 = arith.addf %3, %7 : vector<32x128xf32>
    %c0_6 = arith.constant 0 : index
    %c0_7 = arith.constant 0 : index
    %9 = vector.load %arg8[%c0_6, %c0_7] : memref<32x128xf32, #tpu.memory_space<vmem>>, vector<32x128xf32>
    tpu.vector_store %arg8[%c0_6, %c0_7], %8 {strides = array<i32>} : memref<32x128xf32, #tpu.memory_space<vmem>>, vector<32x128xf32>,
    %c7_i32 = arith.constant 7 : i32
    %10 = arith.cmpi eq, %arg1, %c7_i32 : i32
    %11 = arith.extui %10 : i1 to i32
    %c0_i32_8 = arith.constant 0 : i32
    %12 = arith.cmpi ne, %11, %c0_i32_8 : i32
    scf.if %12 {
      %c0_9 = arith.constant 0 : index
      %c0_10 = arith.constant 0 : index
      %13 = vector.load %arg8[%c0_9, %c0_10] : memref<32x128xf32, #tpu.memory_space<vmem>>, vector<32x128xf32>
      %c0_11 = arith.constant 0 : index
      %c0_12 = arith.constant 0 : index
      %14 = vector.load %arg4[%c0_11, %c0_12] : memref<1x128xf32, #tpu.memory_space<vmem>>, vector<1x128xf32>
      %15 = vector.broadcast %14 : vector<1x128xf32> to vector<32x128xf32>
      %16 = arith.addf %13, %15 : vector<32x128xf32>
      %cst_13 = arith.constant dense<0.000000e+00> : vector<32xf32>
      %17 = vector.multi_reduction <add>, %16, %cst_13 [1] : vector<32x128xf32> to vector<32xf32>
      %18 = vector.shape_cast %17 : vector<32xf32> to vector<32x1xf32>
      %cst_14 = arith.constant 1.280000e+02 : f32
      %19 = vector.broadcast %cst_14 : f32 to vector<32x1xf32>
      %20 = arith.divf %18, %19 : vector<32x1xf32>
      %21 = arith.mulf %16, %16 : vector<32x128xf32>
      %cst_15 = arith.constant dense<0.000000e+00> : vector<32xf32>
      %22 = vector.multi_reduction <add>, %21, %cst_15 [1] : vector<32x128xf32> to vector<32xf32>
      %23 = vector.shape_cast %22 : vector<32xf32> to vector<32x1xf32>
      %cst_16 = arith.constant 1.280000e+02 : f32
      %24 = vector.broadcast %cst_16 : f32 to vector<32x1xf32>
      %25 = arith.divf %23, %24 : vector<32x1xf32>
      %26 = vector.broadcast %20 : vector<32x1xf32> to vector<32x128xf32>
      %27 = arith.subf %16, %26 : vector<32x128xf32>
      %28 = arith.mulf %20, %20 : vector<32x1xf32>
      %29 = arith.subf %25, %28 : vector<32x1xf32>
      %cst_17 = arith.constant 9.99999974E-6 : f32
      %30 = vector.broadcast %cst_17 : f32 to vector<32x1xf32>
      %31 = arith.addf %29, %30 : vector<32x1xf32>
      %32 = math.rsqrt %31 : vector<32x1xf32>
      %33 = vector.broadcast %32 : vector<32x1xf32> to vector<32x128xf32>
      %34 = arith.mulf %27, %33 : vector<32x128xf32>
      %c0_18 = arith.constant 0 : index
      %c0_19 = arith.constant 0 : index
      %35 = vector.load %arg5[%c0_18, %c0_19] : memref<1x128xf32, #tpu.memory_space<vmem>>, vector<1x128xf32>
      %36 = vector.broadcast %35 : vector<1x128xf32> to vector<32x128xf32>
      %37 = arith.mulf %34, %36 : vector<32x128xf32>
      %c0_20 = arith.constant 0 : index
      %c0_21 = arith.constant 0 : index
      %38 = vector.load %arg6[%c0_20, %c0_21] : memref<1x128xf32, #tpu.memory_space<vmem>>, vector<1x128xf32>
      %39 = vector.broadcast %38 : vector<1x128xf32> to vector<32x128xf32>
      %40 = arith.addf %37, %39 : vector<32x128xf32>
      %c0_22 = arith.constant 0 : index
      %c0_23 = arith.constant 0 : index
      %41 = vector.load %arg7[%c0_22, %c0_23] : memref<32x128xf32, #tpu.memory_space<vmem>>, vector<32x128xf32>
      tpu.vector_store %arg7[%c0_22, %c0_23], %40 {strides = array<i32>} : memref<32x128xf32, #tpu.memory_space<vmem>>, vector<32x128xf32>,
    } else {
    }
    return
  }
  func.func @transform_0(%arg0: i32, %arg1: i32) -> (i32, i32) {
    %c0_i32 = arith.constant 0 : i32
    return %arg0, %arg1 : i32, i32
  }
  func.func @transform_1(%arg0: i32, %arg1: i32) -> (i32, i32) {
    %c0_i32 = arith.constant 0 : i32
    %c0_i32_0 = arith.constant 0 : i32
    return %arg1, %c0_i32 : i32, i32
  }
  func.func @transform_2(%arg0: i32, %arg1: i32) -> (i32, i32) {
    %c0_i32 = arith.constant 0 : i32
    %c0_i32_0 = arith.constant 0 : i32
    %c0_i32_1 = arith.constant 0 : i32
    return %c0_i32, %c0_i32_0 : i32, i32
  }
  func.func @transform_3(%arg0: i32, %arg1: i32) -> (i32, i32) {
    %c0_i32 = arith.constant 0 : i32
    %c0_i32_0 = arith.constant 0 : i32
    %c0_i32_1 = arith.constant 0 : i32
    return %c0_i32, %c0_i32_0 : i32, i32
  }
  func.func @transform_4(%arg0: i32, %arg1: i32) -> (i32, i32) {
    %c0_i32 = arith.constant 0 : i32
    %c0_i32_0 = arith.constant 0 : i32
    %c0_i32_1 = arith.constant 0 : i32
    return %c0_i32, %c0_i32_0 : i32, i32
  }
  func.func @transform_5(%arg0: i32, %arg1: i32) -> (i32, i32) {
    %c0_i32 = arith.constant 0 : i32
    %c0_i32_0 = arith.constant 0 : i32
    return %arg0, %c0_i32 : i32, i32
  }
}

</mosaic_0001>

<llo_original>
// kernel: tpu_custom_call.1
$region0: #{tpu_custom_call.1}
  #allocation0 [shape = 'u32[]', space=smem, size = 0x4, offset = 0x4, fixed_abs, tag = 'smem constant byte address 0x4 - core index']
  #allocation1 [shape = 'u32[144,128]{1,0:T(1,128)}', space=vmem, size = 0x12000, scoped, tag = 'internal scratch']
  #allocation2 [shape = 'f32[32,128]{1,0:T(8,128)}', space=vmem, size = 0x4000, scoped, tag = 'scratch operand']
  %s0 = inlined_call_operand.hbm [shape: f32[64,8192], index: 0, kind: input, shape index: {}]
  %s1 = inlined_call_operand.hbm [shape: bf16[8192,128], index: 1, kind: input, shape index: {}]
  %s2 = inlined_call_operand.hbm [shape: f32[1,128], index: 2, kind: input, shape index: {}]
  %s3 = inlined_call_operand.hbm [shape: f32[1,128], index: 3, kind: input, shape index: {}]
  %s4 = inlined_call_operand.hbm [shape: f32[1,128], index: 4, kind: input, shape index: {}]
  %s5 = inlined_call_operand.hbm [shape: f32[64,128], index: 5, kind: output, shape index: {}]
  %s6 = sld [smem:[#allocation0]]
  $region81: #{tpu_custom_call.1} parent=0
    _
  %s8 = ssub.s32 1, %s6
  %s9 = scalar_select 0, %s8, %s6
  $region1: #{tpu_custom_call.1} parent=0
    #allocation3 [shape = 'u8[262144]{0}', space=vmem, size = 0x40000, scoped, tag = 'input window, operand 0']
    #allocation4 [shape = 's32[2]{0}', space=sflag, size = 0x8, scoped, tag = 'scoped memory for tpu_custom_call.1']
    #allocation5 [shape = 's32[2]{0}', space=sflag, size = 0x8, scoped, tag = 'scoped memory for tpu_custom_call.1']
    #allocation6 [shape = 'u8[524288]{0}', space=vmem, size = 0x80000, scoped, tag = 'input window, operand 1']
    #allocation7 [shape = 's32[2]{0}', space=sflag, size = 0x8, scoped, tag = 'scoped memory for tpu_custom_call.1']
    #allocation8 [shape = 'u8[512]{0}', space=vmem, size = 0x400, scoped, tag = 'input window, operand 2, single buffered']
    #allocation9 [shape = 'u8[512]{0}', space=vmem, size = 0x400, scoped, tag = 'input window, operand 3, single buffered']
    #allocation10 [shape = 's32[1]{0}', space=sflag, size = 0x4, scoped, tag = 'scoped memory for tpu_custom_call.1']
    #allocation11 [shape = 'u8[512]{0}', space=vmem, size = 0x400, scoped, tag = 'input window, operand 4, single buffered']
    #allocation12 [shape = 'u8[32768]{0}', space=vmem, size = 0x8000, scoped, tag = 'output window, operand 0']
    %10 = vsyncpa [#allocation4], 0
    %s11 = scalar_lea.sflag [#allocation4], 1
    %12 = vsyncpa %s11, 0
    %13 = vsyncpa [#allocation7], 0
    %s14 = scalar_lea.sflag [#allocation7], 1
    %15 = vsyncpa %s14, 0
    %16 = vsyncpa [#allocation10], 0
    %17 = vsyncpa [#allocation5], 0
    %s18 = scalar_lea.sflag [#allocation5], 1
    %19 = vsyncpa %s18, 0
    loop: start=0, step=1, limit=18
    $region2: #{tpu_custom_call.1} parent=1 // loop_pre_header
      _
    $region3: #{tpu_custom_call.1} parent=1 // loop_header
      %s21 = sphi 0, %s25
      %p22 = scmp.ge.s32.totalorder %s21, 18
      %s28 = sphi 0, %s40
      %s29 = sphi 0, %s36
      %s30 = sphi 0, %s28
      %s31 = sphi 0, %s29
      %s32 = sphi 0, %s30
      %s33 = sphi 0, %s31
      %s45 = sphi 0, %s47
      %s48 = sphi 0, %s45
      %s49 = sphi 0, %s48
      %s65 = sphi 0, %s49
      %s71 = sphi 0, %s73
      %s74 = sphi 0, %s71
      %s75 = sphi 0, %s74
      %s91 = sphi 0, %s75
      %s95 = sphi 0, %s95
      %s97 = sphi 0, %s95
      %s98 = sphi 0, %s97
      %s112 = sphi 0, %s98
      %s116 = sphi 0, %s116
      %s118 = sphi 0, %s116
      %s119 = sphi 0, %s118
      %s133 = sphi 0, %s119
      %s137 = sphi 0, %s137
      %s139 = sphi 0, %s137
      %s140 = sphi 0, %s139
      %s154 = sphi 0, %s140
      %s160 = sphi 0, %s162
      %s163 = sphi 0, %s160
      %s164 = sphi 0, %s163
      %s180 = sphi 0, %s164
    $region4: #{tpu_custom_call.1} parent=1 // loop_header_branch
      %24 = sbr.rel (%p22) target = $region8
    $region5: #{tpu_custom_call.1} parent=1 // loop_body
      %s26 = ssub.s32 %s21, 1
      %s27 = ssub.s32 %s21, 2
      %s34 = sadd.s32 1, %s29
      %p35 = scmp.ge.s32.totalorder %s34, 8
      %s36 = scalar_select %p35, 0, %s34
      %s37 = sadd.s32 1, %s28
      %s38 = scalar_select %p35, %s37, %s28
      %p39 = scmp.ge.s32.totalorder %s38, 2
      %s40 = scalar_select %p39, 0, %s38
      %s41 = ssub.s32 %s28, %s40
      %s42 = ssub.s32 %s29, %s36
      %s43 = sor.u32 %s41, %s42
      %p44 = scmp.eq.s32.totalorder %s43, 0
      %s46 = sadd.s32 %s45, 1
      %s47 = scalar_select %p44, %s45, %s46
      %p50 = pneg %p44
      %p51 = scmp.eq.s32.totalorder %s21, 15
      %p52 = por %p50, %p51
      %p53 = scmp.ne.s32.totalorder %s45, %s48
      %p54 = scmp.eq.s32.totalorder %s21, 0
      %p55 = por %p53, %p54
      %p56 = scmp.ne.s32.totalorder %s45, %s48
      %p57 = scmp.eq.s32.totalorder %s26, 15
      %p58 = por %p56, %p57
      %p59 = scmp.ne.s32.totalorder %s48, %s49
      %p60 = scmp.eq.s32.totalorder %s26, 0
      %p61 = por %p59, %p60
      %p62 = scmp.ne.s32.totalorder %s48, %s49
      %p63 = scmp.eq.s32.totalorder %s27, 15
      %p64 = por %p62, %p63
      %p66 = scmp.ne.s32.totalorder %s49, %s65
      %p67 = scmp.eq.s32.totalorder %s27, 0
      %p68 = por %p66, %p67
      %s69 = ssub.s32 %s29, %s36
      %p70 = scmp.eq.s32.totalorder %s69, 0
      %s72 = sadd.s32 %s71, 1
      %s73 = scalar_select %p70, %s71, %s72
      %p76 = pneg %p70
      %p77 = scmp.eq.s32.totalorder %s21, 15
      %p78 = por %p76, %p77
      %p79 = scmp.ne.s32.totalorder %s71, %s74
      %p80 = scmp.eq.s32.totalorder %s21, 0
      %p81 = por %p79, %p80
      %p82 = scmp.ne.s32.totalorder %s71, %s74
      %p83 = scmp.eq.s32.totalorder %s26, 15
      %p84 = por %p82, %p83
      %p85 = scmp.ne.s32.totalorder %s74, %s75
      %p86 = scmp.eq.s32.totalorder %s26, 0
      %p87 = por %p85, %p86
      %p88 = scmp.ne.s32.totalorder %s74, %s75
      %p89 = scmp.eq.s32.totalorder %s27, 15
      %p90 = por %p88, %p89
      %p92 = scmp.ne.s32.totalorder %s75, %s91
      %p93 = scmp.eq.s32.totalorder %s27, 0
      %p94 = por %p92, %p93
      %s96 = sadd.s32 %s95, 1
      %p99 = scmp.eq.s32.totalorder %s21, 15
      %p100 = scmp.ne.s32.totalorder %s95, %s97
      %p101 = scmp.eq.s32.totalorder %s21, 0
      %p102 = por %p100, %p101
      %p103 = scmp.ne.s32.totalorder %s95, %s97
      %p104 = scmp.eq.s32.totalorder %s26, 15
      %p105 = por %p103, %p104
      %p106 = scmp.ne.s32.totalorder %s97, %s98
      %p107 = scmp.eq.s32.totalorder %s26, 0
      %p108 = por %p106, %p107
      %p109 = scmp.ne.s32.totalorder %s97, %s98
      %p110 = scmp.eq.s32.totalorder %s27, 15
      %p111 = por %p109, %p110
      %p113 = scmp.ne.s32.totalorder %s98, %s112
      %p114 = scmp.eq.s32.totalorder %s27, 0
      %p115 = por %p113, %p114
      %s117 = sadd.s32 %s116, 1
      %p120 = scmp.eq.s32.totalorder %s21, 15
      %p121 = scmp.ne.s32.totalorder %s116, %s118
      %p122 = scmp.eq.s32.totalorder %s21, 0
      %p123 = por %p121, %p122
      %p124 = scmp.ne.s32.totalorder %s116, %s118
      %p125 = scmp.eq.s32.totalorder %s26, 15
      %p126 = por %p124, %p125
      %p127 = scmp.ne.s32.totalorder %s118, %s119
      %p128 = scmp.eq.s32.totalorder %s26, 0
      %p129 = por %p127, %p128
      %p130 = scmp.ne.s32.totalorder %s118, %s119
      %p131 = scmp.eq.s32.totalorder %s27, 15
      %p132 = por %p130, %p131
      %p134 = scmp.ne.s32.totalorder %s119, %s133
      %p135 = scmp.eq.s32.totalorder %s27, 0
      %p136 = por %p134, %p135
      %s138 = sadd.s32 %s137, 1
      %p141 = scmp.eq.s32.totalorder %s21, 15
      %p142 = scmp.ne.s32.totalorder %s137, %s139
      %p143 = scmp.eq.s32.totalorder %s21, 0
      %p144 = por %p142, %p143
      %p145 = scmp.ne.s32.totalorder %s137, %s139
      %p146 = scmp.eq.s32.totalorder %s26, 15
      %p147 = por %p145, %p146
      %p148 = scmp.ne.s32.totalorder %s139, %s140
      %p149 = scmp.eq.s32.totalorder %s26, 0
      %p150 = por %p148, %p149
      %p151 = scmp.ne.s32.totalorder %s139, %s140
      %p152 = scmp.eq.s32.totalorder %s27, 15
      %p153 = por %p151, %p152
      %p155 = scmp.ne.s32.totalorder %s140, %s154
      %p156 = scmp.eq.s32.totalorder %s27, 0
      %p157 = por %p155, %p156
      %s158 = ssub.s32 %s28, %s40
      %p159 = scmp.eq.s32.totalorder %s158, 0
      %s161 = sadd.s32 %s160, 1
      %s162 = scalar_select %p159, %s160, %s161
      %p165 = pneg %p159
      %p166 = scmp.eq.s32.totalorder %s21, 15
      %p167 = por %p165, %p166
      %p168 = scmp.ne.s32.totalorder %s160, %s163
      %p169 = scmp.eq.s32.totalorder %s21, 0
      %p170 = por %p168, %p169
      %p171 = scmp.ne.s32.totalorder %s160, %s163
      %p172 = scmp.eq.s32.totalorder %s26, 15
      %p173 = por %p171, %p172
      %p174 = scmp.ne.s32.totalorder %s163, %s164
      %p175 = scmp.eq.s32.totalorder %s26, 0
      %p176 = por %p174, %p175
      %p177 = scmp.ne.s32.totalorder %s163, %s164
      %p178 = scmp.eq.s32.totalorder %s27, 15
      %p179 = por %p177, %p178
      %p181 = scmp.ne.s32.totalorder %s164, %s180
      %p182 = scmp.eq.s32.totalorder %s27, 0
      %p183 = por %p181, %p182
      %p184 = scmp.le.s32.totalorder 1, %s21
      %p185 = scmp.lt.s32.totalorder %s21, 17
      %p186 = pnand %p184, %p185
      %p187 = pneg %p186
      // Predicated region
      $region9: #{tpu_custom_call.1} parent=5 // pred_check
        _
      $region10: #{tpu_custom_call.1} parent=5 // pred_check_branch
        %189 = sbr.rel (%p186) target = $region12
      $region11: #{tpu_custom_call.1} parent=5 // pred_region
        %s190 = ssub.s32 %s21, 1
        // Predicated region
        $region13: #{tpu_custom_call.1} parent=11 // pred_check
          %p191 = pneg %p108
        $region14: #{tpu_custom_call.1} parent=11 // pred_check_branch
          %193 = sbr.rel (%p191) target = $region16
        $region15: #{tpu_custom_call.1} parent=11 // pred_region
          %s195 = ssub.s32 16, 16
          %196 = vsyncadd [#allocation7], %s195
          %s198 = sshll.u32 [#allocation8], 4
          %s199 = int_to_ptr.vmem [resolvable:$true] %s198
          %201 = dma.hbm_to_vmem [thread:$0]  %s2, 16, %s199, [#allocation7]
        $region16: #{tpu_custom_call.1} parent=11 // pred_fallthru
          _
        // Predicated region
        $region17: #{tpu_custom_call.1} parent=11 // pred_check
          %p202 = pneg %p129
        $region18: #{tpu_custom_call.1} parent=11 // pred_check_branch
          %204 = sbr.rel (%p202) target = $region20
        $region19: #{tpu_custom_call.1} parent=11 // pred_region
          %s206 = ssub.s32 16, 16
          %207 = vsyncadd [#allocation10], %s206
          %s209 = sshll.u32 [#allocation9], 4
          %s210 = int_to_ptr.vmem [resolvable:$true] %s209
          %212 = dma.hbm_to_vmem [thread:$0]  %s3, 16, %s210, [#allocation10]
        $region20: #{tpu_custom_call.1} parent=11 // pred_fallthru
          _
        // Predicated region
        $region21: #{tpu_custom_call.1} parent=11 // pred_check
          %p213 = pneg %p150
        $region22: #{tpu_custom_call.1} parent=11 // pred_check_branch
          %215 = sbr.rel (%p213) target = $region24
        $region23: #{tpu_custom_call.1} parent=11 // pred_region
          %s217 = ssub.s32 16, 16
          %218 = vsyncadd [#allocation10], %s217
          %s220 = sshll.u32 [#allocation11], 4
          %s221 = int_to_ptr.vmem [resolvable:$true] %s220
          %223 = dma.hbm_to_vmem [thread:$0]  %s4, 16, %s221, [#allocation10]
        $region24: #{tpu_custom_call.1} parent=11 // pred_fallthru
          _
      $region12: #{tpu_custom_call.1} parent=5 // pred_fallthru
        _
      %p224 = scmp.lt.s32.totalorder %s21, 16
      // Predicated region
      $region25: #{tpu_custom_call.1} parent=5 // pred_check
        %p225 = pneg %p224
      $region26: #{tpu_custom_call.1} parent=5 // pred_check_branch
        %227 = sbr.rel (%p225) target = $region28
      $region27: #{tpu_custom_call.1} parent=5 // pred_region
        // Predicated region
        $region29: #{tpu_custom_call.1} parent=27 // pred_check
          %p228 = pneg %p55
        $region30: #{tpu_custom_call.1} parent=27 // pred_check_branch
          %230 = sbr.rel (%p228) target = $region32
        $region31: #{tpu_custom_call.1} parent=27 // pred_region
          %s231 = sand.u32 %s45, 1
          %s232 = scalar_lea.sflag [#allocation4], %s231
          %s233 = sand.u32 %s45, 1
          %s234 = smul.addr %s233, 256
          %s235 = scalar_lea.vmem [#allocation3], %s234
          %s236 = smul.u32 4, %s28
          %s237 = smul.u32 8, %s29
          %s239 = ssub.s32 4096, 4096
          %240 = vsyncadd %s232, %s239
          %s241 = smul.addr %s236, 64
          %s242 = sadd.s32 %s237, %s241
          %s243 = smul.addr %s242, 128
          %s244 = scalar_lea.hbm %s0, %s243
          %s245 = sshll.u32 %s235, 4
          %s246 = int_to_ptr.vmem [resolvable:$true] %s245
          %251 = dma.hbm_to_vmem [thread:$0]  %s244, 4096, %s246, %s232, 8192, 1024, 64
        $region32: #{tpu_custom_call.1} parent=27 // pred_fallthru
          _
        // Predicated region
        $region33: #{tpu_custom_call.1} parent=27 // pred_check
          %p252 = pneg %p81
        $region34: #{tpu_custom_call.1} parent=27 // pred_check_branch
          %254 = sbr.rel (%p252) target = $region36
        $region35: #{tpu_custom_call.1} parent=27 // pred_region
          %s255 = sand.u32 %s21, 1
          %s256 = scalar_lea.sflag [#allocation7], %s255
          %s257 = sand.u32 %s71, 1
          %s258 = smul.addr %s257, 512
          %s259 = scalar_lea.vmem [#allocation6], %s258
          %s260 = smul.u32 128, %s29
          %s262 = ssub.s32 8192, 8192
          %263 = vsyncadd %s256, %s262
          %s264 = smul.addr %s260, 64
          %s265 = scalar_lea.hbm %s1, %s264
          %s266 = sshll.u32 %s259, 4
          %s267 = int_to_ptr.vmem [resolvable:$true] %s266
          %272 = dma.hbm_to_vmem [thread:$0]  %s265, 8192, %s267, %s256, 64, 64, 4
        $region36: #{tpu_custom_call.1} parent=27 // pred_fallthru
          _
      $region28: #{tpu_custom_call.1} parent=5 // pred_fallthru
        _
      %p273 = scmp.le.s32.totalorder 1, %s21
      %p274 = scmp.lt.s32.totalorder %s21, 17
      %p275 = pnand %p273, %p274
      %p276 = pneg %p275
      // Predicated region
      $region37: #{tpu_custom_call.1} parent=5 // pred_check
        _
      $region38: #{tpu_custom_call.1} parent=5 // pred_check_branch
        %278 = sbr.rel (%p275) target = $region40
      $region39: #{tpu_custom_call.1} parent=5 // pred_region
        %s279 = ssub.s32 %s21, 1
        %s280 = sand.u32 %s48, 1
        %s281 = scalar_lea.sflag [#allocation4], %s280
        %s282 = sand.u32 %s48, 1
        %s283 = smul.addr %s282, 256
        %s284 = scalar_lea.vmem [#allocation3], %s283
        // Predicated region
        $region41: #{tpu_custom_call.1} parent=39 // pred_check
          %p285 = pneg %p61
        $region42: #{tpu_custom_call.1} parent=39 // pred_check_branch
          %287 = sbr.rel (%p285) target = $region44
        $region43: #{tpu_custom_call.1} parent=39 // pred_region
          %288 = dma.done %s281, 4096
        $region44: #{tpu_custom_call.1} parent=39 // pred_fallthru
          _
        %s289 = sand.u32 %s26, 1
        %s290 = scalar_lea.sflag [#allocation7], %s289
        %s291 = sand.u32 %s74, 1
        %s292 = smul.addr %s291, 512
        %s293 = scalar_lea.vmem [#allocation6], %s292
        // Predicated region
        $region45: #{tpu_custom_call.1} parent=39 // pred_check
          %p294 = pneg %p87
        $region46: #{tpu_custom_call.1} parent=39 // pred_check_branch
          %296 = sbr.rel (%p294) target = $region48
        $region47: #{tpu_custom_call.1} parent=39 // pred_region
          %297 = dma.done %s290, 8192
        $region48: #{tpu_custom_call.1} parent=39 // pred_fallthru
          _
        // Predicated region
        $region49: #{tpu_custom_call.1} parent=39 // pred_check
          %p298 = pneg %p108
        $region50: #{tpu_custom_call.1} parent=39 // pred_check_branch
          %300 = sbr.rel (%p298) target = $region52
        $region51: #{tpu_custom_call.1} parent=39 // pred_region
          %301 = dma.done [#allocation7], 16
        $region52: #{tpu_custom_call.1} parent=39 // pred_fallthru
          _
        // Predicated region
        $region53: #{tpu_custom_call.1} parent=39 // pred_check
          %p302 = pneg %p129
        $region54: #{tpu_custom_call.1} parent=39 // pred_check_branch
          %304 = sbr.rel (%p302) target = $region56
        $region55: #{tpu_custom_call.1} parent=39 // pred_region
          %305 = dma.done [#allocation10], 16
        $region56: #{tpu_custom_call.1} parent=39 // pred_fallthru
          _
        // Predicated region
        $region57: #{tpu_custom_call.1} parent=39 // pred_check
          %p306 = pneg %p150
        $region58: #{tpu_custom_call.1} parent=39 // pred_check_branch
          %308 = sbr.rel (%p306) target = $region60
        $region59: #{tpu_custom_call.1} parent=39 // pred_region
          %309 = dma.done [#allocation10], 16
        $region60: #{tpu_custom_call.1} parent=39 // pred_fallthru
          _
        %s310 = sand.u32 %s48, 1
        %s311 = scalar_lea.sflag [#allocation4], %s310
        %s312 = sand.u32 %s48, 1
        %s313 = smul.addr %s312, 256
        %s314 = scalar_lea.vmem [#allocation3], %s313
        %p315 = pneg %p61
        %p316 = pneg %p58
        %s317 = sand.u32 %s26, 1
        %s318 = scalar_lea.sflag [#allocation7], %s317
        %s319 = sand.u32 %s74, 1
        %s320 = smul.addr %s319, 512
        %s321 = scalar_lea.vmem [#allocation6], %s320
        %p322 = pneg %p87
        %p323 = pneg %p84
        %p324 = pneg %p108
        %p325 = pneg %p105
        %p326 = pneg %p129
        %p327 = pneg %p126
        %p328 = pneg %p150
        %p329 = pneg %p147
        %p330 = pneg %p176
        %p331 = pneg %p173
        %s332 = sand.u32 %s163, 1
        %s333 = scalar_lea.sflag [#allocation5], %s332
        %s334 = sand.u32 %s163, 1
        %s335 = smul.addr %s334, 32
        %s336 = scalar_lea.vmem [#allocation12], %s335
        %s337 = smul.u32 4, %s30
        %s338 = smul.u32 8, %s31
        %s339 = smul.u32 128, %s31
        %s340 = smul.u32 4, %s30
        %p342 = scmp.eq.s32.totalorder %s31, 0
        // Predicated region
        $region61: #{tpu_custom_call.1} parent=39 // pred_check
          %p343 = pneg %p342
        $region62: #{tpu_custom_call.1} parent=39 // pred_check_branch
          %345 = sbr.rel (%p343) target = $region64
        $region63: #{tpu_custom_call.1} parent=39 // pred_region
          %346 = vst [vmem:[#allocation2] sm:$0xff] 0.0
          %347 = vst [vmem:[#allocation2 + $0x8] sm:$0xff] 0.0
          %348 = vst [vmem:[#allocation2 + $0x10] sm:$0xff] 0.0
          %349 = vst [vmem:[#allocation2 + $0x18] sm:$0xff] 0.0
        $region64: #{tpu_custom_call.1} parent=39 // pred_fallthru
          _
        %v350 = vld [vmem:[#allocation2] sm:$0xff]
        %v351 = vld [vmem:[#allocation2 + $0x8] sm:$0xff]
        %v352 = vld [vmem:[#allocation2 + $0x10] sm:$0xff]
        %v353 = vld [vmem:[#allocation2 + $0x18] sm:$0xff]
        %v354 = vld [vmem:[%s284] sm:$0xff]
        %v355 = vld [vmem:[%s284 + $0x8] sm:$0xff]
        %v356 = vld [vmem:[%s284 + $0x10] sm:$0xff]
        %v357 = vld [vmem:[%s284 + $0x18] sm:$0xff]
        %v358 = vld [vmem:[%s284 + $0x20] sm:$0xff]
        %v359 = vld [vmem:[%s284 + $0x28] sm:$0xff]
        %v360 = vld [vmem:[%s284 + $0x30] sm:$0xff]
        %v361 = vld [vmem:[%s284 + $0x38] sm:$0xff]
        %v362 = vld [vmem:[%s284 + $0x40] sm:$0xff]
        %v363 = vld [vmem:[%s284 + $0x48] sm:$0xff]
        %v364 = vld [vmem:[%s284 + $0x50] sm:$0xff]
        %v365 = vld [vmem:[%s284 + $0x58] sm:$0xff]
        %v366 = vld [vmem:[%s284 + $0x60] sm:$0xff]
        %v367 = vld [vmem:[%s284 + $0x68] sm:$0xff]
        %v368 = vld [vmem:[%s284 + $0x70] sm:$0xff]
        %v369 = vld [vmem:[%s284 + $0x78] sm:$0xff]
        %v370 = vld [vmem:[%s284 + $0x80] sm:$0xff]
        %v371 = vld [vmem:[%s284 + $0x88] sm:$0xff]
        %v372 = vld [vmem:[%s284 + $0x90] sm:$0xff]
        %v373 = vld [vmem:[%s284 + $0x98] sm:$0xff]
        %v374 = vld [vmem:[%s284 + $0xa0] sm:$0xff]
        %v375 = vld [vmem:[%s284 + $0xa8] sm:$0xff]
        %v376 = vld [vmem:[%s284 + $0xb0] sm:$0xff]
        %v377 = vld [vmem:[%s284 + $0xb8] sm:$0xff]
        %v378 = vld [vmem:[%s284 + $0xc0] sm:$0xff]
        %v379 = vld [vmem:[%s284 + $0xc8] sm:$0xff]
        %v380 = vld [vmem:[%s284 + $0xd0] sm:$0xff]
        %v381 = vld [vmem:[%s284 + $0xd8] sm:$0xff]
        %v382 = vld [vmem:[%s284 + $0xe0] sm:$0xff]
        %v383 = vld [vmem:[%s284 + $0xe8] sm:$0xff]
        %v384 = vld [vmem:[%s284 + $0xf0] sm:$0xff]
        %v385 = vld [vmem:[%s284 + $0xf8] sm:$0xff]
        %v386 = vpack.c.bf16 %v362, %v354
        %v387 = vpack.c.bf16 %v363, %v355
        %v388 = vpack.c.bf16 %v364, %v356
        %v389 = vpack.c.bf16 %v365, %v357
        %v390 = vpack.c.bf16 %v366, %v358
        %v391 = vpack.c.bf16 %v367, %v359
        %v392 = vpack.c.bf16 %v368, %v360
        %v393 = vpack.c.bf16 %v369, %v361
        %v394 = vpack.c.bf16 %v378, %v370
        %v395 = vpack.c.bf16 %v379, %v371
        %v396 = vpack.c.bf16 %v380, %v372
        %v397 = vpack.c.bf16 %v381, %v373
        %v398 = vpack.c.bf16 %v382, %v374
        %v399 = vpack.c.bf16 %v383, %v375
        %v400 = vpack.c.bf16 %v384, %v376
        %v401 = vpack.c.bf16 %v385, %v377
        %v402 = vld [vmem:[%s293] sm:$0xf]
        %v403 = vld [vmem:[%s293 + $0x4] sm:$0xf]
        %v404 = vld [vmem:[%s293 + $0x8] sm:$0xf]
        %v405 = vld [vmem:[%s293 + $0xc] sm:$0xf]
        %v406 = vld [vmem:[%s293 + $0x10] sm:$0xf]
        %v407 = vld [vmem:[%s293 + $0x14] sm:$0xf]
        %v408 = vld [vmem:[%s293 + $0x18] sm:$0xf]
        %v409 = vld [vmem:[%s293 + $0x1c] sm:$0xf]
        %v410 = vld [vmem:[%s293 + $0x20] sm:$0xf]
        %v411 = vld [vmem:[%s293 + $0x24] sm:$0xf]
        %v412 = vld [vmem:[%s293 + $0x28] sm:$0xf]
        %v413 = vld [vmem:[%s293 + $0x2c] sm:$0xf]
        %v414 = vld [vmem:[%s293 + $0x30] sm:$0xf]
        %v415 = vld [vmem:[%s293 + $0x34] sm:$0xf]
        %v416 = vld [vmem:[%s293 + $0x38] sm:$0xf]
        %v417 = vld [vmem:[%s293 + $0x3c] sm:$0xf]
        %v418 = vld [vmem:[%s293 + $0x40] sm:$0xf]
        %v419 = vld [vmem:[%s293 + $0x44] sm:$0xf]
        %v420 = vld [vmem:[%s293 + $0x48] sm:$0xf]
        %v421 = vld [vmem:[%s293 + $0x4c] sm:$0xf]
        %v422 = vld [vmem:[%s293 + $0x50] sm:$0xf]
        %v423 = vld [vmem:[%s293 + $0x54] sm:$0xf]
        %v424 = vld [vmem:[%s293 + $0x58] sm:$0xf]
        %v425 = vld [vmem:[%s293 + $0x5c] sm:$0xf]
        %v426 = vld [vmem:[%s293 + $0x60] sm:$0xf]
        %v427 = vld [vmem:[%s293 + $0x64] sm:$0xf]
        %v428 = vld [vmem:[%s293 + $0x68] sm:$0xf]
        %v429 = vld [vmem:[%s293 + $0x6c] sm:$0xf]
        %v430 = vld [vmem:[%s293 + $0x70] sm:$0xf]
        %v431 = vld [vmem:[%s293 + $0x74] sm:$0xf]
        %v432 = vld [vmem:[%s293 + $0x78] sm:$0xf]
        %v433 = vld [vmem:[%s293 + $0x7c] sm:$0xf]
        %v434 = vld [vmem:[%s293 + $0x80] sm:$0xf]
        %v435 = vld [vmem:[%s293 + $0x84] sm:$0xf]
        %v436 = vld [vmem:[%s293 + $0x88] sm:$0xf]
        %v437 = vld [vmem:[%s293 + $0x8c] sm:$0xf]
        %v438 = vld [vmem:[%s293 + $0x90] sm:$0xf]
        %v439 = vld [vmem:[%s293 + $0x94] sm:$0xf]
        %v440 = vld [vmem:[%s293 + $0x98] sm:$0xf]
        %v441 = vld [vmem:[%s293 + $0x9c] sm:$0xf]
        %v442 = vld [vmem:[%s293 + $0xa0] sm:$0xf]
        %v443 = vld [vmem:[%s293 + $0xa4] sm:$0xf]
        %v444 = vld [vmem:[%s293 + $0xa8] sm:$0xf]
        %v445 = vld [vmem:[%s293 + $0xac] sm:$0xf]
        %v446 = vld [vmem:[%s293 + $0xb0] sm:$0xf]
        %v447 = vld [vmem:[%s293 + $0xb4] sm:$0xf]
        %v448 = vld [vmem:[%s293 + $0xb8] sm:$0xf]
        %v449 = vld [vmem:[%s293 + $0xbc] sm:$0xf]
        %v450 = vld [vmem:[%s293 + $0xc0] sm:$0xf]
        %v451 = vld [vmem:[%s293 + $0xc4] sm:$0xf]
        %v452 = vld [vmem:[%s293 + $0xc8] sm:$0xf]
        %v453 = vld [vmem:[%s293 + $0xcc] sm:$0xf]
        %v454 = vld [vmem:[%s293 + $0xd0] sm:$0xf]
        %v455 = vld [vmem:[%s293 + $0xd4] sm:$0xf]
        %v456 = vld [vmem:[%s293 + $0xd8] sm:$0xf]
        %v457 = vld [vmem:[%s293 + $0xdc] sm:$0xf]
        %v458 = vld [vmem:[%s293 + $0xe0] sm:$0xf]
        %v459 = vld [vmem:[%s293 + $0xe4] sm:$0xf]
        %v460 = vld [vmem:[%s293 + $0xe8] sm:$0xf]
        %v461 = vld [vmem:[%s293 + $0xec] sm:$0xf]
        %v462 = vld [vmem:[%s293 + $0xf0] sm:$0xf]
        %v463 = vld [vmem:[%s293 + $0xf4] sm:$0xf]
        %v464 = vld [vmem:[%s293 + $0xf8] sm:$0xf]
        %v465 = vld [vmem:[%s293 + $0xfc] sm:$0xf]
        %v466 = vld [vmem:[%s293 + $0x100] sm:$0xf]
        %v467 = vld [vmem:[%s293 + $0x104] sm:$0xf]
        %v468 = vld [vmem:[%s293 + $0x108] sm:$0xf]
        %v469 = vld [vmem:[%s293 + $0x10c] sm:$0xf]
        %v470 = vld [vmem:[%s293 + $0x110] sm:$0xf]
        %v471 = vld [vmem:[%s293 + $0x114] sm:$0xf]
        %v472 = vld [vmem:[%s293 + $0x118] sm:$0xf]
        %v473 = vld [vmem:[%s293 + $0x11c] sm:$0xf]
        %v474 = vld [vmem:[%s293 + $0x120] sm:$0xf]
        %v475 = vld [vmem:[%s293 + $0x124] sm:$0xf]
        %v476 = vld [vmem:[%s293 + $0x128] sm:$0xf]
        %v477 = vld [vmem:[%s293 + $0x12c] sm:$0xf]
        %v478 = vld [vmem:[%s293 + $0x130] sm:$0xf]
        %v479 = vld [vmem:[%s293 + $0x134] sm:$0xf]
        %v480 = vld [vmem:[%s293 + $0x138] sm:$0xf]
        %v481 = vld [vmem:[%s293 + $0x13c] sm:$0xf]
        %v482 = vld [vmem:[%s293 + $0x140] sm:$0xf]
        %v483 = vld [vmem:[%s293 + $0x144] sm:$0xf]
        %v484 = vld [vmem:[%s293 + $0x148] sm:$0xf]
        %v485 = vld [vmem:[%s293 + $0x14c] sm:$0xf]
        %v486 = vld [vmem:[%s293 + $0x150] sm:$0xf]
        %v487 = vld [vmem:[%s293 + $0x154] sm:$0xf]
        %v488 = vld [vmem:[%s293 + $0x158] sm:$0xf]
        %v489 = vld [vmem:[%s293 + $0x15c] sm:$0xf]
        %v490 = vld [vmem:[%s293 + $0x160] sm:$0xf]
        %v491 = vld [vmem:[%s293 + $0x164] sm:$0xf]
        %v492 = vld [vmem:[%s293 + $0x168] sm:$0xf]
        %v493 = vld [vmem:[%s293 + $0x16c] sm:$0xf]
        %v494 = vld [vmem:[%s293 + $0x170] sm:$0xf]
        %v495 = vld [vmem:[%s293 + $0x174] sm:$0xf]
        %v496 = vld [vmem:[%s293 + $0x178] sm:$0xf]
        %v497 = vld [vmem:[%s293 + $0x17c] sm:$0xf]
        %v498 = vld [vmem:[%s293 + $0x180] sm:$0xf]
        %v499 = vld [vmem:[%s293 + $0x184] sm:$0xf]
        %v500 = vld [vmem:[%s293 + $0x188] sm:$0xf]
        %v501 = vld [vmem:[%s293 + $0x18c] sm:$0xf]
        %v502 = vld [vmem:[%s293 + $0x190] sm:$0xf]
        %v503 = vld [vmem:[%s293 + $0x194] sm:$0xf]
        %v504 = vld [vmem:[%s293 + $0x198] sm:$0xf]
        %v505 = vld [vmem:[%s293 + $0x19c] sm:$0xf]
        %v506 = vld [vmem:[%s293 + $0x1a0] sm:$0xf]
        %v507 = vld [vmem:[%s293 + $0x1a4] sm:$0xf]
        %v508 = vld [vmem:[%s293 + $0x1a8] sm:$0xf]
        %v509 = vld [vmem:[%s293 + $0x1ac] sm:$0xf]
        %v510 = vld [vmem:[%s293 + $0x1b0] sm:$0xf]
        %v511 = vld [vmem:[%s293 + $0x1b4] sm:$0xf]
        %v512 = vld [vmem:[%s293 + $0x1b8] sm:$0xf]
        %v513 = vld [vmem:[%s293 + $0x1bc] sm:$0xf]
        %v514 = vld [vmem:[%s293 + $0x1c0] sm:$0xf]
        %v515 = vld [vmem:[%s293 + $0x1c4] sm:$0xf]
        %v516 = vld [vmem:[%s293 + $0x1c8] sm:$0xf]
        %v517 = vld [vmem:[%s293 + $0x1cc] sm:$0xf]
        %v518 = vld [vmem:[%s293 + $0x1d0] sm:$0xf]
        %v519 = vld [vmem:[%s293 + $0x1d4] sm:$0xf]
        %v520 = vld [vmem:[%s293 + $0x1d8] sm:$0xf]
        %v521 = vld [vmem:[%s293 + $0x1dc] sm:$0xf]
        %v522 = vld [vmem:[%s293 + $0x1e0] sm:$0xf]
        %v523 = vld [vmem:[%s293 + $0x1e4] sm:$0xf]
        %v524 = vld [vmem:[%s293 + $0x1e8] sm:$0xf]
        %v525 = vld [vmem:[%s293 + $0x1ec] sm:$0xf]
        %v526 = vld [vmem:[%s293 + $0x1f0] sm:$0xf]
        %v527 = vld [vmem:[%s293 + $0x1f4] sm:$0xf]
        %v528 = vld [vmem:[%s293 + $0x1f8] sm:$0xf]
        %v529 = vld [vmem:[%s293 + $0x1fc] sm:$0xf]
        %v658 = vunpack.c.l.b16 %v402
        %v659 = vunpack.c.l.b16 %v403
        %v660 = vunpack.c.l.b16 %v404
        %v661 = vunpack.c.l.b16 %v405
        %v662 = vunpack.c.l.b16 %v406
        %v663 = vunpack.c.l.b16 %v407
        %v664 = vunpack.c.l.b16 %v408
        %v665 = vunpack.c.l.b16 %v409
        %v666 = vunpack.c.l.b16 %v410
        %v667 = vunpack.c.l.b16 %v411
        %v668 = vunpack.c.l.b16 %v412
        %v669 = vunpack.c.l.b16 %v413
        %v670 = vunpack.c.l.b16 %v414
        %v671 = vunpack.c.l.b16 %v415
        %v672 = vunpack.c.l.b16 %v416
        %v673 = vunpack.c.l.b16 %v417
        %v674 = vunpack.c.l.b16 %v418
        %v675 = vunpack.c.l.b16 %v419
        %v676 = vunpack.c.l.b16 %v420
        %v677 = vunpack.c.l.b16 %v421
        %v678 = vunpack.c.l.b16 %v422
        %v679 = vunpack.c.l.b16 %v423
        %v680 = vunpack.c.l.b16 %v424
        %v681 = vunpack.c.l.b16 %v425
        %v682 = vunpack.c.l.b16 %v426
        %v683 = vunpack.c.l.b16 %v427
        %v684 = vunpack.c.l.b16 %v428
        %v685 = vunpack.c.l.b16 %v429
        %v686 = vunpack.c.l.b16 %v430
        %v687 = vunpack.c.l.b16 %v431
        %v688 = vunpack.c.l.b16 %v432
        %v689 = vunpack.c.l.b16 %v433
        %v690 = vunpack.c.l.b16 %v434
        %v691 = vunpack.c.l.b16 %v435
        %v692 = vunpack.c.l.b16 %v436
        %v693 = vunpack.c.l.b16 %v437
        %v694 = vunpack.c.l.b16 %v438
        %v695 = vunpack.c.l.b16 %v439
        %v696 = vunpack.c.l.b16 %v440
        %v697 = vunpack.c.l.b16 %v441
        %v698 = vunpack.c.l.b16 %v442
        %v699 = vunpack.c.l.b16 %v443
        %v700 = vunpack.c.l.b16 %v444
        %v701 = vunpack.c.l.b16 %v445
        %v702 = vunpack.c.l.b16 %v446
        %v703 = vunpack.c.l.b16 %v447
        %v704 = vunpack.c.l.b16 %v448
        %v705 = vunpack.c.l.b16 %v449
        %v706 = vunpack.c.l.b16 %v450
        %v707 = vunpack.c.l.b16 %v451
        %v708 = vunpack.c.l.b16 %v452
        %v709 = vunpack.c.l.b16 %v453
        %v710 = vunpack.c.l.b16 %v454
        %v711 = vunpack.c.l.b16 %v455
        %v712 = vunpack.c.l.b16 %v456
        %v713 = vunpack.c.l.b16 %v457
        %v714 = vunpack.c.l.b16 %v458
        %v715 = vunpack.c.l.b16 %v459
        %v716 = vunpack.c.l.b16 %v460
        %v717 = vunpack.c.l.b16 %v461
        %v718 = vunpack.c.l.b16 %v462
        %v719 = vunpack.c.l.b16 %v463
        %v720 = vunpack.c.l.b16 %v464
        %v721 = vunpack.c.l.b16 %v465
        %v722 = vunpack.c.l.b16 %v466
        %v723 = vunpack.c.l.b16 %v467
        %v724 = vunpack.c.l.b16 %v468
        %v725 = vunpack.c.l.b16 %v469
        %v726 = vunpack.c.l.b16 %v470
        %v727 = vunpack.c.l.b16 %v471
        %v728 = vunpack.c.l.b16 %v472
        %v729 = vunpack.c.l.b16 %v473
        %v730 = vunpack.c.l.b16 %v474
        %v731 = vunpack.c.l.b16 %v475
        %v732 = vunpack.c.l.b16 %v476
        %v733 = vunpack.c.l.b16 %v477
        %v734 = vunpack.c.l.b16 %v478
        %v735 = vunpack.c.l.b16 %v479
        %v736 = vunpack.c.l.b16 %v480
        %v737 = vunpack.c.l.b16 %v481
        %v738 = vunpack.c.l.b16 %v482
        %v739 = vunpack.c.l.b16 %v483
        %v740 = vunpack.c.l.b16 %v484
        %v741 = vunpack.c.l.b16 %v485
        %v742 = vunpack.c.l.b16 %v486
        %v743 = vunpack.c.l.b16 %v487
        %v744 = vunpack.c.l.b16 %v488
        %v745 = vunpack.c.l.b16 %v489
        %v746 = vunpack.c.l.b16 %v490
        %v747 = vunpack.c.l.b16 %v491
        %v748 = vunpack.c.l.b16 %v492
        %v749 = vunpack.c.l.b16 %v493
        %v750 = vunpack.c.l.b16 %v494
        %v751 = vunpack.c.l.b16 %v495
        %v752 = vunpack.c.l.b16 %v496
        %v753 = vunpack.c.l.b16 %v497
        %v754 = vunpack.c.l.b16 %v498
        %v755 = vunpack.c.l.b16 %v499
        %v756 = vunpack.c.l.b16 %v500
        %v757 = vunpack.c.l.b16 %v501
        %v758 = vunpack.c.l.b16 %v502
        %v759 = vunpack.c.l.b16 %v503
        %v760 = vunpack.c.l.b16 %v504
        %v761 = vunpack.c.l.b16 %v505
        %v762 = vunpack.c.l.b16 %v506
        %v763 = vunpack.c.l.b16 %v507
        %v764 = vunpack.c.l.b16 %v508
        %v765 = vunpack.c.l.b16 %v509
        %v766 = vunpack.c.l.b16 %v510
        %v767 = vunpack.c.l.b16 %v511
        %v768 = vunpack.c.l.b16 %v512
        %v769 = vunpack.c.l.b16 %v513
        %v770 = vunpack.c.l.b16 %v514
        %v771 = vunpack.c.l.b16 %v515
        %v772 = vunpack.c.l.b16 %v516
        %v773 = vunpack.c.l.b16 %v517
        %v774 = vunpack.c.l.b16 %v518
        %v775 = vunpack.c.l.b16 %v519
        %v776 = vunpack.c.l.b16 %v520
        %v777 = vunpack.c.l.b16 %v521
        %v778 = vunpack.c.l.b16 %v522
        %v779 = vunpack.c.l.b16 %v523
        %v780 = vunpack.c.l.b16 %v524
        %v781 = vunpack.c.l.b16 %v525
        %v782 = vunpack.c.l.b16 %v526
        %v783 = vunpack.c.l.b16 %v527
        %v784 = vunpack.c.l.b16 %v528
        %v785 = vunpack.c.l.b16 %v529
        %v786 = vpack.c.b16 %v659, %v658
        %v787 = vpack.c.b16 %v661, %v660
        %v788 = vpack.c.b16 %v663, %v662
        %v789 = vpack.c.b16 %v665, %v664
        %v790 = vpack.c.b16 %v667, %v666
        %v791 = vpack.c.b16 %v669, %v668
        %v792 = vpack.c.b16 %v671, %v670
        %v793 = vpack.c.b16 %v673, %v672
        %v794 = vpack.c.b16 %v675, %v674
        %v795 = vpack.c.b16 %v677, %v676
        %v796 = vpack.c.b16 %v679, %v678
        %v797 = vpack.c.b16 %v681, %v680
        %v798 = vpack.c.b16 %v683, %v682
        %v799 = vpack.c.b16 %v685, %v684
        %v800 = vpack.c.b16 %v687, %v686
        %v801 = vpack.c.b16 %v689, %v688
        %v802 = vpack.c.b16 %v691, %v690
        %v803 = vpack.c.b16 %v693, %v692
        %v804 = vpack.c.b16 %v695, %v694
        %v805 = vpack.c.b16 %v697, %v696
        %v806 = vpack.c.b16 %v699, %v698
        %v807 = vpack.c.b16 %v701, %v700
        %v808 = vpack.c.b16 %v703, %v702
        %v809 = vpack.c.b16 %v705, %v704
        %v810 = vpack.c.b16 %v707, %v706
        %v811 = vpack.c.b16 %v709, %v708
        %v812 = vpack.c.b16 %v711, %v710
        %v813 = vpack.c.b16 %v713, %v712
        %v814 = vpack.c.b16 %v715, %v714
        %v815 = vpack.c.b16 %v717, %v716
        %v816 = vpack.c.b16 %v719, %v718
        %v817 = vpack.c.b16 %v721, %v720
        %v818 = vpack.c.b16 %v723, %v722
        %v819 = vpack.c.b16 %v725, %v724
        %v820 = vpack.c.b16 %v727, %v726
        %v821 = vpack.c.b16 %v729, %v728
        %v822 = vpack.c.b16 %v731, %v730
        %v823 = vpack.c.b16 %v733, %v732
        %v824 = vpack.c.b16 %v735, %v734
        %v825 = vpack.c.b16 %v737, %v736
        %v826 = vpack.c.b16 %v739, %v738
        %v827 = vpack.c.b16 %v741, %v740
        %v828 = vpack.c.b16 %v743, %v742
        %v829 = vpack.c.b16 %v745, %v744
        %v830 = vpack.c.b16 %v747, %v746
        %v831 = vpack.c.b16 %v749, %v748
        %v832 = vpack.c.b16 %v751, %v750
        %v833 = vpack.c.b16 %v753, %v752
        %v834 = vpack.c.b16 %v755, %v754
        %v835 = vpack.c.b16 %v757, %v756
        %v836 = vpack.c.b16 %v759, %v758
        %v837 = vpack.c.b16 %v761, %v760
        %v838 = vpack.c.b16 %v763, %v762
        %v839 = vpack.c.b16 %v765, %v764
        %v840 = vpack.c.b16 %v767, %v766
        %v841 = vpack.c.b16 %v769, %v768
        %v842 = vpack.c.b16 %v771, %v770
        %v843 = vpack.c.b16 %v773, %v772
        %v844 = vpack.c.b16 %v775, %v774
        %v845 = vpack.c.b16 %v777, %v776
        %v846 = vpack.c.b16 %v779, %v778
        %v847 = vpack.c.b16 %v781, %v780
        %v848 = vpack.c.b16 %v783, %v782
        %v849 = vpack.c.b16 %v785, %v784
        %914 = vmatprep.subr.bf16.mxu0 0
        %915 = vmatpush1.bf16.msra.mxu0 %v786
        %916 = vmatprep.subr.bf16.mxu0 0
        %917 = vmatpush1.bf16.msra.mxu0 %v787
        %918 = vmatprep.subr.bf16.mxu0 0
        %919 = vmatpush1.bf16.msra.mxu0 %v788
        %920 = vmatprep.subr.bf16.mxu0 0
        %921 = vmatpush1.bf16.msra.mxu0 %v789
        %922 = vmatprep.subr.bf16.mxu0 0
        %923 = vmatpush1.bf16.msra.mxu0 %v790
        %924 = vmatprep.subr.bf16.mxu0 0
        %925 = vmatpush1.bf16.msra.mxu0 %v791
        %926 = vmatprep.subr.bf16.mxu0 0
        %927 = vmatpush1.bf16.msra.mxu0 %v792
        %928 = vmatprep.subr.bf16.mxu0 0
        %929 = vmatpush1.bf16.msra.mxu0 %v793
        %930 = vmatprep.subr.bf16.mxu0 0
        %931 = vmatpush1.bf16.msra.mxu0 %v794
        %932 = vmatprep.subr.bf16.mxu0 0
        %933 = vmatpush1.bf16.msra.mxu0 %v795
        %934 = vmatprep.subr.bf16.mxu0 0
        %935 = vmatpush1.bf16.msra.mxu0 %v796
        %936 = vmatprep.subr.bf16.mxu0 0
        %937 = vmatpush1.bf16.msra.mxu0 %v797
        %938 = vmatprep.subr.bf16.mxu0 0
        %939 = vmatpush1.bf16.msra.mxu0 %v798
        %940 = vmatprep.subr.bf16.mxu0 0
        %941 = vmatpush1.bf16.msra.mxu0 %v799
        %942 = vmatprep.subr.bf16.mxu0 0
        %943 = vmatpush1.bf16.msra.mxu0 %v800
        %944 = vmatprep.subr.bf16.mxu0 0
        %945 = vmatpush1.bf16.msra.mxu0 %v801
        %946 = vmatprep.mubr.bf16.mxu0 %v387
        %947 = vmatmul.mubr.bf16.gmra.mrb[0].mxu0 %v386
        %v948 = vpop.f32.mrb[0].mxu0
        %v949 = vadd.f32 0.0, %v948
        %v950 = vpop.f32.mrb[0].mxu0
        %v951 = vpop.f32.mrb[0].mxu0
        %v952 = vadd.f32 0.0, %v951
        %v953 = vpop.f32.mrb[0].mxu0
        %954 = vmatprep.mubr.bf16.mxu0 %v395
        %955 = vmatmul.mubr.bf16.gmra.mrb[0].mxu0 %v394
        %v956 = vpop.f32.mrb[0].mxu0
        %v957 = vadd.f32 0.0, %v956
        %v958 = vpop.f32.mrb[0].mxu0
        %v959 = vpop.f32.mrb[0].mxu0
        %v960 = vadd.f32 0.0, %v959
        %v961 = vpop.f32.mrb[0].mxu0
        %962 = vdwg.mxu0
        %963 = vmatprep.subr.bf16.mxu0 0
        %964 = vmatpush1.bf16.msra.mxu0 %v802
        %965 = vmatprep.subr.bf16.mxu0 0
        %966 = vmatpush1.bf16.msra.mxu0 %v803
        %967 = vmatprep.subr.bf16.mxu0 0
        %968 = vmatpush1.bf16.msra.mxu0 %v804
        %969 = vmatprep.subr.bf16.mxu0 0
        %970 = vmatpush1.bf16.msra.mxu0 %v805
        %971 = vmatprep.subr.bf16.mxu0 0
        %972 = vmatpush1.bf16.msra.mxu0 %v806
        %973 = vmatprep.subr.bf16.mxu0 0
        %974 = vmatpush1.bf16.msra.mxu0 %v807
        %975 = vmatprep.subr.bf16.mxu0 0
        %976 = vmatpush1.bf16.msra.mxu0 %v808
        %977 = vmatprep.subr.bf16.mxu0 0
        %978 = vmatpush1.bf16.msra.mxu0 %v809
        %979 = vmatprep.subr.bf16.mxu0 0
        %980 = vmatpush1.bf16.msra.mxu0 %v810
        %981 = vmatprep.subr.bf16.mxu0 0
        %982 = vmatpush1.bf16.msra.mxu0 %v811
        %983 = vmatprep.subr.bf16.mxu0 0
        %984 = vmatpush1.bf16.msra.mxu0 %v812
        %985 = vmatprep.subr.bf16.mxu0 0
        %986 = vmatpush1.bf16.msra.mxu0 %v813
        %987 = vmatprep.subr.bf16.mxu0 0
        %988 = vmatpush1.bf16.msra.mxu0 %v814
        %989 = vmatprep.subr.bf16.mxu0 0
        %990 = vmatpush1.bf16.msra.mxu0 %v815
        %991 = vmatprep.subr.bf16.mxu0 0
        %992 = vmatpush1.bf16.msra.mxu0 %v816
        %993 = vmatprep.subr.bf16.mxu0 0
        %994 = vmatpush1.bf16.msra.mxu0 %v817
        %995 = vmatprep.mubr.bf16.mxu0 %v389
        %996 = vmatmul.mubr.bf16.gmra.mrb[0].mxu0 %v388
        %v997 = vpop.f32.mrb[0].mxu0
        %v998 = vadd.f32 %v949, %v997
        %v999 = vpop.f32.mrb[0].mxu0
        %v1000 = vpop.f32.mrb[0].mxu0
        %v1001 = vadd.f32 %v952, %v1000
        %v1002 = vpop.f32.mrb[0].mxu0
        %1003 = vmatprep.mubr.bf16.mxu0 %v397
        %1004 = vmatmul.mubr.bf16.gmra.mrb[0].mxu0 %v396
        %v1005 = vpop.f32.mrb[0].mxu0
        %v1006 = vadd.f32 %v957, %v1005
        %v1007 = vpop.f32.mrb[0].mxu0
        %v1008 = vpop.f32.mrb[0].mxu0
        %v1009 = vadd.f32 %v960, %v1008
        %v1010 = vpop.f32.mrb[0].mxu0
        %1011 = vdwg.mxu0
        %1012 = vmatprep.subr.bf16.mxu0 0
        %1013 = vmatpush1.bf16.msra.mxu0 %v818
        %1014 = vmatprep.subr.bf16.mxu0 0
        %1015 = vmatpush1.bf16.msra.mxu0 %v819
        %1016 = vmatprep.subr.bf16.mxu0 0
        %1017 = vmatpush1.bf16.msra.mxu0 %v820
        %1018 = vmatprep.subr.bf16.mxu0 0
        %1019 = vmatpush1.bf16.msra.mxu0 %v821
        %1020 = vmatprep.subr.bf16.mxu0 0
        %1021 = vmatpush1.bf16.msra.mxu0 %v822
        %1022 = vmatprep.subr.bf16.mxu0 0
        %1023 = vmatpush1.bf16.msra.mxu0 %v823
        %1024 = vmatprep.subr.bf16.mxu0 0
        %1025 = vmatpush1.bf16.msra.mxu0 %v824
        %1026 = vmatprep.subr.bf16.mxu0 0
        %1027 = vmatpush1.bf16.msra.mxu0 %v825
        %1028 = vmatprep.subr.bf16.mxu0 0
        %1029 = vmatpush1.bf16.msra.mxu0 %v826
        %1030 = vmatprep.subr.bf16.mxu0 0
        %1031 = vmatpush1.bf16.msra.mxu0 %v827
        %1032 = vmatprep.subr.bf16.mxu0 0
        %1033 = vmatpush1.bf16.msra.mxu0 %v828
        %1034 = vmatprep.subr.bf16.mxu0 0
        %1035 = vmatpush1.bf16.msra.mxu0 %v829
        %1036 = vmatprep.subr.bf16.mxu0 0
        %1037 = vmatpush1.bf16.msra.mxu0 %v830
        %1038 = vmatprep.subr.bf16.mxu0 0
        %1039 = vmatpush1.bf16.msra.mxu0 %v831
        %1040 = vmatprep.subr.bf16.mxu0 0
        %1041 = vmatpush1.bf16.msra.mxu0 %v832
        %1042 = vmatprep.subr.bf16.mxu0 0
        %1043 = vmatpush1.bf16.msra.mxu0 %v833
        %1044 = vmatprep.mubr.bf16.mxu0 %v391
        %1045 = vmatmul.mubr.bf16.gmra.mrb[0].mxu0 %v390
        %v1046 = vpop.f32.mrb[0].mxu0
        %v1047 = vadd.f32 %v998, %v1046
        %v1048 = vpop.f32.mrb[0].mxu0
        %v1049 = vpop.f32.mrb[0].mxu0
        %v1050 = vadd.f32 %v1001, %v1049
        %v1051 = vpop.f32.mrb[0].mxu0
        %1052 = vmatprep.mubr.bf16.mxu0 %v399
        %1053 = vmatmul.mubr.bf16.gmra.mrb[0].mxu0 %v398
        %v1054 = vpop.f32.mrb[0].mxu0
        %v1055 = vadd.f32 %v1006, %v1054
        %v1056 = vpop.f32.mrb[0].mxu0
        %v1057 = vpop.f32.mrb[0].mxu0
        %v1058 = vadd.f32 %v1009, %v1057
        %v1059 = vpop.f32.mrb[0].mxu0
        %1060 = vdwg.mxu0
        %1061 = vmatprep.subr.bf16.mxu0 0
        %1062 = vmatpush1.bf16.msra.mxu0 %v834
        %1063 = vmatprep.subr.bf16.mxu0 0
        %1064 = vmatpush1.bf16.msra.mxu0 %v835
        %1065 = vmatprep.subr.bf16.mxu0 0
        %1066 = vmatpush1.bf16.msra.mxu0 %v836
        %1067 = vmatprep.subr.bf16.mxu0 0
        %1068 = vmatpush1.bf16.msra.mxu0 %v837
        %1069 = vmatprep.subr.bf16.mxu0 0
        %1070 = vmatpush1.bf16.msra.mxu0 %v838
        %1071 = vmatprep.subr.bf16.mxu0 0
        %1072 = vmatpush1.bf16.msra.mxu0 %v839
        %1073 = vmatprep.subr.bf16.mxu0 0
        %1074 = vmatpush1.bf16.msra.mxu0 %v840
        %1075 = vmatprep.subr.bf16.mxu0 0
        %1076 = vmatpush1.bf16.msra.mxu0 %v841
        %1077 = vmatprep.subr.bf16.mxu0 0
        %1078 = vmatpush1.bf16.msra.mxu0 %v842
        %1079 = vmatprep.subr.bf16.mxu0 0
        %1080 = vmatpush1.bf16.msra.mxu0 %v843
        %1081 = vmatprep.subr.bf16.mxu0 0
        %1082 = vmatpush1.bf16.msra.mxu0 %v844
        %1083 = vmatprep.subr.bf16.mxu0 0
        %1084 = vmatpush1.bf16.msra.mxu0 %v845
        %1085 = vmatprep.subr.bf16.mxu0 0
        %1086 = vmatpush1.bf16.msra.mxu0 %v846
        %1087 = vmatprep.subr.bf16.mxu0 0
        %1088 = vmatpush1.bf16.msra.mxu0 %v847
        %1089 = vmatprep.subr.bf16.mxu0 0
        %1090 = vmatpush1.bf16.msra.mxu0 %v848
        %1091 = vmatprep.subr.bf16.mxu0 0
        %1092 = vmatpush1.bf16.msra.mxu0 %v849
        %1093 = vmatprep.mubr.bf16.mxu0 %v393
        %1094 = vmatmul.mubr.bf16.gmra.mrb[0].mxu0 %v392
        %v1095 = vpop.f32.mrb[0].mxu0
        %v1096 = vadd.f32 %v1047, %v1095
        %v1097 = vpop.f32.mrb[0].mxu0
        %v1098 = vpop.f32.mrb[0].mxu0
        %v1099 = vadd.f32 %v1050, %v1098
        %v1100 = vpop.f32.mrb[0].mxu0
        %1101 = vmatprep.mubr.bf16.mxu0 %v401
        %1102 = vmatmul.mubr.bf16.gmra.mrb[0].mxu0 %v400
        %v1103 = vpop.f32.mrb[0].mxu0
        %v1104 = vadd.f32 %v1055, %v1103
        %v1105 = vpop.f32.mrb[0].mxu0
        %v1106 = vpop.f32.mrb[0].mxu0
        %v1107 = vadd.f32 %v1058, %v1106
        %v1108 = vpop.f32.mrb[0].mxu0
        %1109 = vdwg.mxu0
        %v1110 = vadd.f32 %v350, %v1096
        %v1111 = vadd.f32 %v351, %v1099
        %v1112 = vadd.f32 %v352, %v1104
        %v1113 = vadd.f32 %v353, %v1107
        %1114 = vst [vmem:[#allocation2] sm:$0xff] %v1110
        %1115 = vst [vmem:[#allocation2 + $0x8] sm:$0xff] %v1111
        %1116 = vst [vmem:[#allocation2 + $0x10] sm:$0xff] %v1112
        %1117 = vst [vmem:[#allocation2 + $0x18] sm:$0xff] %v1113
        %p1118 = scmp.eq.s32.totalorder %s31, 7
        // Predicated region
        $region65: #{tpu_custom_call.1} parent=39 // pred_check
          %p1119 = pneg %p1118
        $region66: #{tpu_custom_call.1} parent=39 // pred_check_branch
          %1121 = sbr.rel (%p1119) target = $region68
        $region67: #{tpu_custom_call.1} parent=39 // pred_region
          %v1122 = vld [vmem:[#allocation2] sm:$0xff]
          %v1123 = vld [vmem:[#allocation2 + $0x8] sm:$0xff]
          %v1124 = vld [vmem:[#allocation2 + $0x10] sm:$0xff]
          %v1125 = vld [vmem:[#allocation2 + $0x18] sm:$0xff]
          %v1126 = vld [vmem:[#allocation8] sm:$0x1]
          %v1128 = vlaneseq
          %v1129 = vshrl.u32 %v1128, 7
          %v1130 = vsub.s32 0, %v1129
          %v1131 = vrot.slane %v1126, %v1130
          %v1133 = vadd.f32 %v1122, %v1131
          %v1134 = vadd.f32 %v1123, %v1131
          %v1135 = vadd.f32 %v1124, %v1131
          %v1136 = vadd.f32 %v1125, %v1131
          %1137 = vadd.xlane.f32.xlu0 %v1133
          %v1138 = vpop.xlane.xlu0 %1137
          %1139 = vadd.xlane.f32.xlu0 %v1134
          %v1140 = vpop.xlane.xlu0 %1139
          %1141 = vadd.xlane.f32.xlu0 %v1135
          %v1142 = vpop.xlane.xlu0 %1141
          %1143 = vadd.xlane.f32.xlu0 %v1136
          %v1144 = vpop.xlane.xlu0 %1143
          %v1145 = vrcp.pop 128.0
          %v1146 = vmul.f32 %v1138, %v1145
          %v1147 = vmul.f32 %v1140, %v1145
          %v1148 = vmul.f32 %v1142, %v1145
          %v1149 = vmul.f32 %v1144, %v1145
          %v1150 = vmul.f32 %v1133, %v1133
          %v1151 = vmul.f32 %v1134, %v1134
          %v1152 = vmul.f32 %v1135, %v1135
          %v1153 = vmul.f32 %v1136, %v1136
          %1154 = vadd.xlane.f32.xlu0 %v1150
          %v1155 = vpop.xlane.xlu0 %1154
          %1156 = vadd.xlane.f32.xlu0 %v1151
          %v1157 = vpop.xlane.xlu0 %1156
          %1158 = vadd.xlane.f32.xlu0 %v1152
          %v1159 = vpop.xlane.xlu0 %1158
          %1160 = vadd.xlane.f32.xlu0 %v1153
          %v1161 = vpop.xlane.xlu0 %1160
          %v1162 = vmul.f32 %v1155, %v1145
          %v1163 = vmul.f32 %v1157, %v1145
          %v1164 = vmul.f32 %v1159, %v1145
          %v1165 = vmul.f32 %v1161, %v1145
          %v1166 = vsub.f32 %v1133, %v1146
          %v1167 = vsub.f32 %v1134, %v1147
          %v1168 = vsub.f32 %v1135, %v1148
          %v1169 = vsub.f32 %v1136, %v1149
          %v1170 = vmul.f32 %v1146, %v1146
          %v1171 = vmul.f32 %v1147, %v1147
          %v1172 = vmul.f32 %v1148, %v1148
          %v1173 = vmul.f32 %v1149, %v1149
          %v1174 = vsub.f32 %v1162, %v1170
          %v1175 = vsub.f32 %v1163, %v1171
          %v1176 = vsub.f32 %v1164, %v1172
          %v1177 = vsub.f32 %v1165, %v1173
          %v1178 = vadd.f32 %v1174, 1e-05
          %v1179 = vadd.f32 %v1175, 1e-05
          %v1180 = vadd.f32 %v1176, 1e-05
          %v1181 = vadd.f32 %v1177, 1e-05
          %v1182 = vrsqrt.pop %v1178
          %v1183 = vrsqrt.pop %v1179
          %v1184 = vrsqrt.pop %v1180
          %v1185 = vrsqrt.pop %v1181
          %v1186 = vmul.f32 %v1166, %v1182
          %v1187 = vmul.f32 %v1167, %v1183
          %v1188 = vmul.f32 %v1168, %v1184
          %v1189 = vmul.f32 %v1169, %v1185
          %v1190 = vld [vmem:[#allocation9] sm:$0x1]
          %v1192 = vlaneseq
          %v1193 = vshrl.u32 %v1192, 7
          %v1194 = vsub.s32 0, %v1193
          %v1195 = vrot.slane %v1190, %v1194
          %v1197 = vmul.f32 %v1186, %v1195
          %v1198 = vmul.f32 %v1187, %v1195
          %v1199 = vmul.f32 %v1188, %v1195
          %v1200 = vmul.f32 %v1189, %v1195
          %v1201 = vld [vmem:[#allocation11] sm:$0x1]
          %v1203 = vlaneseq
          %v1204 = vshrl.u32 %v1203, 7
          %v1205 = vsub.s32 0, %v1204
          %v1206 = vrot.slane %v1201, %v1205
          %v1208 = vadd.f32 %v1197, %v1206
          %v1209 = vadd.f32 %v1198, %v1206
          %v1210 = vadd.f32 %v1199, %v1206
          %v1211 = vadd.f32 %v1200, %v1206
          %1212 = vst [vmem:[%s336] sm:$0xff] %v1208
          %1213 = vst [vmem:[%s336 + $0x8] sm:$0xff] %v1209
          %1214 = vst [vmem:[%s336 + $0x10] sm:$0xff] %v1210
          %1215 = vst [vmem:[%s336 + $0x18] sm:$0xff] %v1211
        $region68: #{tpu_custom_call.1} parent=39 // pred_fallthru
          _
        %s1216 = sand.u32 %s163, 1
        %s1217 = scalar_lea.sflag [#allocation5], %s1216
        %s1218 = sand.u32 %s163, 1
        %s1219 = smul.addr %s1218, 32
        %s1220 = scalar_lea.vmem [#allocation12], %s1219
        // Predicated region
        $region69: #{tpu_custom_call.1} parent=39 // pred_check
          %p1221 = pneg %p173
        $region70: #{tpu_custom_call.1} parent=39 // pred_check_branch
          %1223 = sbr.rel (%p1221) target = $region72
        $region71: #{tpu_custom_call.1} parent=39 // pred_region
          %s1224 = smul.u32 4, %s30
          %s1226 = ssub.s32 512, 512
          %1227 = vsyncadd %s1217, %s1226
          %s1228 = smul.addr %s1224, 128
          %s1229 = scalar_lea.hbm %s5, %s1228
          %s1230 = sshll.u32 %s1220, 4
          %s1231 = int_to_ptr.vmem [resolvable:$true] %s1230
          %1236 = dma.vmem_to_hbm [thread:$0]  %s1231, 512, %s1229, %s1217, 128, 128, 8
        $region72: #{tpu_custom_call.1} parent=39 // pred_fallthru
          _
      $region40: #{tpu_custom_call.1} parent=5 // pred_fallthru
        _
      %p1237 = scmp.le.s32.totalorder 2, %s21
      // Predicated region
      $region73: #{tpu_custom_call.1} parent=5 // pred_check
        %p1238 = pneg %p1237
      $region74: #{tpu_custom_call.1} parent=5 // pred_check_branch
        %1240 = sbr.rel (%p1238) target = $region76
      $region75: #{tpu_custom_call.1} parent=5 // pred_region
        %s1241 = ssub.s32 %s21, 2
        // Predicated region
        $region77: #{tpu_custom_call.1} parent=75 // pred_check
          %p1242 = pneg %p179
        $region78: #{tpu_custom_call.1} parent=75 // pred_check_branch
          %1244 = sbr.rel (%p1242) target = $region80
        $region79: #{tpu_custom_call.1} parent=75 // pred_region
          %s1245 = sand.u32 %s164, 1
          %s1246 = scalar_lea.sflag [#allocation5], %s1245
          %s1247 = sand.u32 %s164, 1
          %s1248 = smul.addr %s1247, 32
          %s1249 = scalar_lea.vmem [#allocation12], %s1248
          %1250 = dma.done %s1246, 512
        $region80: #{tpu_custom_call.1} parent=75 // pred_fallthru
          _
      $region76: #{tpu_custom_call.1} parent=5 // pred_fallthru
        _
    $region6: #{tpu_custom_call.1} parent=1 // loop_footer
      %s25 = sadd.s32 1, %s21
    $region7: #{tpu_custom_call.1} parent=1 // loop_footer_branch
      %20 = sbr.rel target = $region3
    $region8: #{tpu_custom_call.1} parent=1 // loop_exit
      _
    %1251 = vsyncpa [#allocation4], 1
    %s1252 = scalar_lea.sflag [#allocation4], 1
    %1253 = vsyncpa %s1252, 1
    %1254 = vsyncpa [#allocation7], 1
    %s1255 = scalar_lea.sflag [#allocation7], 1
    %1256 = vsyncpa %s1255, 1
    %1257 = vsyncpa [#allocation10], 1
    %1258 = vsyncpa [#allocation5], 1
    %s1259 = scalar_lea.sflag [#allocation5], 1
    %1260 = vsyncpa %s1259, 1

</llo_original>
